<compile_context>
chip_gen: v7x
topology: tpu7x:2x2x1
jax: 0.10.0
libtpu: 0.0.40
codegen_flags: <defaults>
</compile_context>

<pallas_src>
import jax
import jax.numpy as jnp
from jax.experimental import pallas as pl
from jax.experimental.pallas import tpu as pltpu

N_HIDDEN = 64
SUBLANE = 8


def _round_up(x, m):
    return ((x + m - 1) // m) * m


def _choose_tile_b(b_pad, max_tile):
    """Batch tile: one block for small batches; otherwise an even number of
    tiles (each a multiple of 8 sublanes) so the 'parallel' batch axis splits
    evenly across v7x's two TensorCores."""
    if b_pad <= max_tile:
        return b_pad
    n_tiles = 2 * pl.cdiv(b_pad, 2 * max_tile)      # even tile count
    return _round_up(pl.cdiv(b_pad, n_tiles), SUBLANE)


def policy_net_kernel(x_ref, w1_ref, b1_ref, w2_ref, b2_ref, out_ref):
    # fc1 (MXU) + bias + ReLU (VPU, f32), then fc2 (MXU) + bias.
    x = x_ref[...]
    h = jnp.dot(x, w1_ref[...], preferred_element_type=jnp.float32) + b1_ref[...]
    h = jnp.maximum(h, 0.0)
    out_ref[...] = (
        jnp.dot(h, w2_ref[...], preferred_element_type=jnp.float32) + b2_ref[...]
    )


def policy_net_forward(x, w1, b1, w2, b2, *, max_tile_b=4096):
    """x: (B, n_inputs) f32. w1: (n_inputs, n_hidden), b1: (1, n_hidden),
    w2: (n_hidden, n_outputs), b2: (1, n_outputs). Returns (B, n_outputs)."""
    B, n_in = x.shape
    n_hid = w1.shape[1]
    n_out = w2.shape[1]

    # Only pad the batch to a sublane multiple (never to a tile multiple);
    # the last (possibly partial) tile is handled by grid masking.
    b_pad = _round_up(B, SUBLANE)
    if b_pad != B:
        x = jnp.pad(x, ((0, b_pad - B), (0, 0)))

    tile_b = _choose_tile_b(b_pad, max_tile_b)
    grid = (pl.cdiv(b_pad, tile_b),)

    flops = 2 * b_pad * (n_in * n_hid + n_hid * n_out)
    bytes_accessed = 4 * (
        b_pad * n_in + b_pad * n_out          # streamed activations
        + n_in * n_hid + n_hid * n_out        # resident weights
        + n_hid + n_out                       # biases
    )

    out = pl.pallas_call(
        policy_net_kernel,
        out_shape=jax.ShapeDtypeStruct((b_pad, n_out), jnp.float32),
        grid=grid,
        in_specs=[
            pl.BlockSpec((tile_b, n_in), lambda i: (i, 0)),   # x: streamed per tile
            pl.BlockSpec((n_in, n_hid), lambda i: (0, 0)),    # w1: resident
            pl.BlockSpec((1, n_hid), lambda i: (0, 0)),       # b1: resident
            pl.BlockSpec((n_hid, n_out), lambda i: (0, 0)),   # w2: resident
            pl.BlockSpec((1, n_out), lambda i: (0, 0)),       # b2: resident
        ],
        out_specs=pl.BlockSpec((tile_b, n_out), lambda i: (i, 0)),
        compiler_params=pltpu.CompilerParams(
            dimension_semantics=("parallel",),   # megacore split on v7x
        ),
        cost_estimate=pl.CostEstimate(
            flops=flops, transcendentals=0, bytes_accessed=bytes_accessed
        ),
    )(x, w1, b1, w2, b2)

    return out[:B] if b_pad != B else out


def init_params(key, n_inputs, n_outputs):
    """Deterministic init matching the module's __init__ semantics:
    weights ~ N(0, 0.3); biases use PyTorch Linear default U(-1/sqrt(fan_in), 1/sqrt(fan_in)).
    Weights stored pre-transposed as (in_features, out_features)."""
    k1, k2, k3, k4 = jax.random.split(key, 4)
    w1 = 0.3 * jax.random.normal(k1, (n_inputs, N_HIDDEN), jnp.float32)
    w2 = 0.3 * jax.random.normal(k2, (N_HIDDEN, n_outputs), jnp.float32)
    bound1 = 1.0 / (n_inputs ** 0.5)
    bound2 = 1.0 / (N_HIDDEN ** 0.5)
    b1 = jax.random.uniform(k3, (1, N_HIDDEN), jnp.float32, -bound1, bound1)
    b2 = jax.random.uniform(k4, (1, n_outputs), jnp.float32, -bound2, bound2)
    return w1, b1, w2, b2


if __name__ == "__main__":
    key = jax.random.PRNGKey(0)
    n_inputs, n_outputs, batch = 8, 4, 2

    kx, kp = jax.random.split(key)
    x = jax.random.normal(kx, (batch, n_inputs), jnp.float32)
    w1, b1, w2, b2 = init_params(kp, n_inputs, n_outputs)

    out = policy_net_forward(x, w1, b1, w2, b2)
    out = jax.block_until_ready(out)

    # Pure-JAX reference check of the same forward pass.
    ref = jnp.maximum(x @ w1 + b1, 0.0) @ w2 + b2
    assert out.shape == (batch, n_outputs)
    assert jnp.allclose(out, ref, atol=1e-5), "mismatch vs reference"

    # Larger batch, single-tile path (grid = 1, batch rounded to 8 only).
    big_B = 1500
    xb = jax.random.normal(jax.random.PRNGKey(1), (big_B, n_inputs), jnp.float32)
    ref_b = jnp.maximum(xb @ w1 + b1, 0.0) @ w2 + b2
    out_b = jax.block_until_ready(policy_net_forward(xb, w1, b1, w2, b2))
    assert out_b.shape == (big_B, n_outputs)
    assert jnp.allclose(out_b, ref_b, atol=1e-4), "mismatch vs reference (big batch)"

    # Multi-tile path with a partial (masked) last tile to exercise the
    # grid / pipelining code without padding the batch to a tile multiple.
    out_m = jax.block_until_ready(
        policy_net_forward(xb, w1, b1, w2, b2, max_tile_b=256)
    )
    assert out_m.shape == (big_B, n_outputs)
    assert jnp.allclose(out_m, ref_b, atol=1e-4), "mismatch vs reference (multi-tile)"

    print("KERNEL_OK")
</pallas_src>

<mosaic_0001>
module attributes {stable_mosaic.version = 11 : i64} {
  func.func @policy_net_kernel(%arg0: i32, %arg1: memref<8x8xf32, #tpu.memory_space<vmem>>, %arg2: memref<8x64xf32, #tpu.memory_space<vmem>>, %arg3: memref<1x64xf32, #tpu.memory_space<vmem>>, %arg4: memref<64x4xf32, #tpu.memory_space<vmem>>, %arg5: memref<1x4xf32, #tpu.memory_space<vmem>>, %arg6: memref<8x4xf32, #tpu.memory_space<vmem>>) attributes {dimension_semantics = [#tpu.dimension_semantics<parallel>], iteration_bounds = array<i64: 1>, scalar_prefetch = 0 : i64, scratch_operands = 0 : i64, tpu.core_type = #tpu.core_type<tc>, window_params = [{transform_indices = @transform_0, window_bounds = array<i64: 8, 8>}, {pipeline_mode = #tpu.pipeline_mode<synchronous>, transform_indices = @transform_1, window_bounds = array<i64: 8, 64>}, {pipeline_mode = #tpu.pipeline_mode<synchronous>, transform_indices = @transform_2, window_bounds = array<i64: 1, 64>}, {pipeline_mode = #tpu.pipeline_mode<synchronous>, transform_indices = @transform_3, window_bounds = array<i64: 64, 4>}, {pipeline_mode = #tpu.pipeline_mode<synchronous>, transform_indices = @transform_4, window_bounds = array<i64: 1, 4>}, {transform_indices = @transform_5, window_bounds = array<i64: 8, 4>}]} {
    %c0 = arith.constant 0 : index
    %c0_0 = arith.constant 0 : index
    %0 = vector.load %arg1[%c0, %c0_0] : memref<8x8xf32, #tpu.memory_space<vmem>>, vector<8x8xf32>
    %c0_1 = arith.constant 0 : index
    %c0_2 = arith.constant 0 : index
    %1 = vector.load %arg2[%c0_1, %c0_2] : memref<8x64xf32, #tpu.memory_space<vmem>>, vector<8x64xf32>
    %cst = arith.constant dense<0.000000e+00> : vector<8x64xf32>
    %2 = tpu.matmul %0, %1, %cst {dimension_numbers = #tpu.dot_dimension_numbers<[1], [0], [0], [1], [0, 0, 1, 1], [], []>} : vector<8x8xf32>, vector<8x64xf32>, vector<8x64xf32> -> vector<8x64xf32>
    %c0_3 = arith.constant 0 : index
    %c0_4 = arith.constant 0 : index
    %3 = vector.load %arg3[%c0_3, %c0_4] : memref<1x64xf32, #tpu.memory_space<vmem>>, vector<1x64xf32>
    %4 = vector.broadcast %3 : vector<1x64xf32> to vector<8x64xf32>
    %5 = arith.addf %2, %4 : vector<8x64xf32>
    %cst_5 = arith.constant 0.000000e+00 : f32
    %6 = vector.broadcast %cst_5 : f32 to vector<8x64xf32>
    %7 = arith.maximumf %5, %6 : vector<8x64xf32>
    %c0_6 = arith.constant 0 : index
    %c0_7 = arith.constant 0 : index
    %8 = vector.load %arg4[%c0_6, %c0_7] : memref<64x4xf32, #tpu.memory_space<vmem>>, vector<64x4xf32>
    %cst_8 = arith.constant dense<0.000000e+00> : vector<8x4xf32>
    %9 = tpu.matmul %7, %8, %cst_8 {dimension_numbers = #tpu.dot_dimension_numbers<[1], [0], [0], [1], [0, 0, 1, 1], [], []>} : vector<8x64xf32>, vector<64x4xf32>, vector<8x4xf32> -> vector<8x4xf32>
    %c0_9 = arith.constant 0 : index
    %c0_10 = arith.constant 0 : index
    %10 = vector.load %arg5[%c0_9, %c0_10] : memref<1x4xf32, #tpu.memory_space<vmem>>, vector<1x4xf32>
    %11 = vector.broadcast %10 : vector<1x4xf32> to vector<8x4xf32>
    %12 = arith.addf %9, %11 : vector<8x4xf32>
    %c0_11 = arith.constant 0 : index
    %c0_12 = arith.constant 0 : index
    %13 = vector.load %arg6[%c0_11, %c0_12] : memref<8x4xf32, #tpu.memory_space<vmem>>, vector<8x4xf32>
    tpu.vector_store %arg6[%c0_11, %c0_12], %12 {strides = array<i32>} : memref<8x4xf32, #tpu.memory_space<vmem>>, vector<8x4xf32>,
    return
  }
  func.func @transform_0(%arg0: i32) -> (i32, i32) {
    %c0_i32 = arith.constant 0 : i32
    %c0_i32_0 = arith.constant 0 : i32
    return %arg0, %c0_i32 : i32, i32
  }
  func.func @transform_1(%arg0: i32) -> (i32, i32) {
    %c0_i32 = arith.constant 0 : i32
    %c0_i32_0 = arith.constant 0 : i32
    %c0_i32_1 = arith.constant 0 : i32
    return %c0_i32, %c0_i32_0 : i32, i32
  }
  func.func @transform_2(%arg0: i32) -> (i32, i32) {
    %c0_i32 = arith.constant 0 : i32
    %c0_i32_0 = arith.constant 0 : i32
    %c0_i32_1 = arith.constant 0 : i32
    return %c0_i32, %c0_i32_0 : i32, i32
  }
  func.func @transform_3(%arg0: i32) -> (i32, i32) {
    %c0_i32 = arith.constant 0 : i32
    %c0_i32_0 = arith.constant 0 : i32
    %c0_i32_1 = arith.constant 0 : i32
    return %c0_i32, %c0_i32_0 : i32, i32
  }
  func.func @transform_4(%arg0: i32) -> (i32, i32) {
    %c0_i32 = arith.constant 0 : i32
    %c0_i32_0 = arith.constant 0 : i32
    %c0_i32_1 = arith.constant 0 : i32
    return %c0_i32, %c0_i32_0 : i32, i32
  }
  func.func @transform_5(%arg0: i32) -> (i32, i32) {
    %c0_i32 = arith.constant 0 : i32
    %c0_i32_0 = arith.constant 0 : i32
    return %arg0, %c0_i32 : i32, i32
  }
}

</mosaic_0001>

<llo_original>
// kernel: tpu_custom_call.1
$region0: #{tpu_custom_call.1}
  #allocation0 [shape = 'u32[]', space=smem, size = 0x4, offset = 0x4, fixed_abs, tag = 'smem constant byte address 0x4 - core index']
  #allocation1 [shape = 'u32[144,128]{1,0:T(1,128)}', space=vmem, size = 0x12000, scoped, tag = 'internal scratch']
  %s0 = inlined_call_operand.vmem [shape: f32[8,8], index: 0, kind: input, shape index: {}]
  %s1 = inlined_call_operand.vmem [shape: f32[8,64], index: 1, kind: input, shape index: {}]
  %s2 = inlined_call_operand.vmem [shape: f32[1,64], index: 2, kind: input, shape index: {}]
  %s3 = inlined_call_operand.vmem [shape: f32[64,4], index: 3, kind: input, shape index: {}]
  %s4 = inlined_call_operand.vmem [shape: f32[1,4], index: 4, kind: input, shape index: {}]
  %s5 = inlined_call_operand.vmem [shape: f32[8,4], index: 5, kind: output, shape index: {}]
  %s6 = sld [smem:[#allocation0]]
  $region30: #{tpu_custom_call.1} parent=0
    _
  %s8 = ssub.s32 1, %s6
  %s9 = scalar_select 0, %s8, %s6
  // Predicated region
  $region2: #{tpu_custom_call.1} parent=0 // pred_check
    _
  $region3: #{tpu_custom_call.1} parent=0 // pred_check_branch
    %11 = sbr.rel (0) target = $region5
  $region4: #{tpu_custom_call.1} parent=0 // pred_region
    _
  $region5: #{tpu_custom_call.1} parent=0 // pred_fallthru
    _
  // Predicated region
  $region6: #{tpu_custom_call.1} parent=0 // pred_check
    _
  $region7: #{tpu_custom_call.1} parent=0 // pred_check_branch
    %13 = sbr.rel (0) target = $region9
  $region8: #{tpu_custom_call.1} parent=0 // pred_region
    _
  $region9: #{tpu_custom_call.1} parent=0 // pred_fallthru
    _
  // Predicated region
  $region10: #{tpu_custom_call.1} parent=0 // pred_check
    _
  $region11: #{tpu_custom_call.1} parent=0 // pred_check_branch
    %15 = sbr.rel (0) target = $region13
  $region12: #{tpu_custom_call.1} parent=0 // pred_region
    _
  $region13: #{tpu_custom_call.1} parent=0 // pred_fallthru
    _
  // Predicated region
  $region14: #{tpu_custom_call.1} parent=0 // pred_check
    _
  $region15: #{tpu_custom_call.1} parent=0 // pred_check_branch
    %17 = sbr.rel (0) target = $region17
  $region16: #{tpu_custom_call.1} parent=0 // pred_region
    _
  $region17: #{tpu_custom_call.1} parent=0 // pred_fallthru
    _
  // Predicated region
  $region18: #{tpu_custom_call.1} parent=0 // pred_check
    _
  $region19: #{tpu_custom_call.1} parent=0 // pred_check_branch
    %19 = sbr.rel (0) target = $region21
  $region20: #{tpu_custom_call.1} parent=0 // pred_region
    _
  $region21: #{tpu_custom_call.1} parent=0 // pred_fallthru
    _
  %v20 = vld [vmem:[%s0] sm:$0xff]
  %v21 = vld [vmem:[%s1] sm:$0xff]
  %v22 = vld [vmem:[%s2] sm:$0x1]
  %v24 = vlaneseq
  %v25 = vshrl.u32 %v24, 7
  %v26 = vsub.s32 0, %v25
  %v27 = vrot.slane %v22, %v26
  %vm29 = vcmask 64512
  %v31 = vsel %vm29, %v20, 0
  %33 = vmatprep.subr.mxu0 0.0
  %34 = vmatpush1.msra.mxu0 %v21
  %35 = vmatprep.subr.mxu0 0.0
  %36 = vmatpush1.msra.mxu0 0.0
  %37 = vmatprep.subr.mxu0 0.0
  %38 = vmatpush1.msra.mxu0 0.0
  %39 = vmatprep.subr.mxu0 0.0
  %40 = vmatpush1.msra.mxu0 0.0
  %41 = vmatprep.subr.mxu0 0.0
  %42 = vmatpush1.msra.mxu0 0.0
  %43 = vmatprep.subr.mxu0 0.0
  %44 = vmatpush1.msra.mxu0 0.0
  %45 = vmatprep.subr.mxu0 0.0
  %46 = vmatpush1.msra.mxu0 0.0
  %47 = vmatprep.subr.mxu0 0.0
  %48 = vmatpush1.msra.mxu0 0.0
  %49 = vmatprep.subr.mxu0 0.0
  %50 = vmatpush1.msra.mxu0 0.0
  %51 = vmatprep.subr.mxu0 0.0
  %52 = vmatpush1.msra.mxu0 0.0
  %53 = vmatprep.subr.mxu0 0.0
  %54 = vmatpush1.msra.mxu0 0.0
  %55 = vmatprep.subr.mxu0 0.0
  %56 = vmatpush1.msra.mxu0 0.0
  %57 = vmatprep.subr.mxu0 0.0
  %58 = vmatpush1.msra.mxu0 0.0
  %59 = vmatprep.subr.mxu0 0.0
  %60 = vmatpush1.msra.mxu0 0.0
  %61 = vmatprep.subr.mxu0 0.0
  %62 = vmatpush1.msra.mxu0 0.0
  %63 = vmatprep.subr.mxu0 0.0
  %64 = vmatpush1.msra.mxu0 0.0
  %65 = vmatprep.subr.mxu0 0.0
  %66 = vmatpush1.msra.mxu0 0.0
  %67 = vmatprep.subr.mxu0 0.0
  %68 = vmatpush1.msra.mxu0 0.0
  %69 = vmatprep.subr.mxu0 0.0
  %70 = vmatpush1.msra.mxu0 0.0
  %71 = vmatprep.subr.mxu0 0.0
  %72 = vmatpush1.msra.mxu0 0.0
  %73 = vmatprep.subr.mxu0 0.0
  %74 = vmatpush1.msra.mxu0 0.0
  %75 = vmatprep.subr.mxu0 0.0
  %76 = vmatpush1.msra.mxu0 0.0
  %77 = vmatprep.subr.mxu0 0.0
  %78 = vmatpush1.msra.mxu0 0.0
  %79 = vmatprep.subr.mxu0 0.0
  %80 = vmatpush1.msra.mxu0 0.0
  %81 = vmatprep.subr.mxu0 0.0
  %82 = vmatpush1.msra.mxu0 0.0
  %83 = vmatprep.subr.mxu0 0.0
  %84 = vmatpush1.msra.mxu0 0.0
  %85 = vmatprep.subr.mxu0 0.0
  %86 = vmatpush1.msra.mxu0 0.0
  %87 = vmatprep.subr.mxu0 0.0
  %88 = vmatpush1.msra.mxu0 0.0
  %89 = vmatprep.subr.mxu0 0.0
  %90 = vmatpush1.msra.mxu0 0.0
  %91 = vmatprep.subr.mxu0 0.0
  %92 = vmatpush1.msra.mxu0 0.0
  %93 = vmatprep.subr.mxu0 0.0
  %94 = vmatpush1.msra.mxu0 0.0
  %95 = vmatprep.subr.mxu0 0.0
  %96 = vmatpush1.msra.mxu0 0.0
  %97 = vmatprep.mubr.f32.mxu0 0.0
  %98 = vmatmul.mubr.f32.gmra.mrb[0].mxu0 %v31
  %v99 = vpop.f32.mrb[0].mxu0
  %v100 = vadd.f32 %v27, %v99
  %v101 = vpop.f32.mrb[0].mxu0
  %102 = vdwg.mxu0
  %v103 = vmax.f32 %v100, 0.0
  %v104 = vld [vmem:[%s3] sm:$0xff]
  %v105 = vld [vmem:[%s3 + $0x8] sm:$0xff]
  %v106 = vld [vmem:[%s3 + $0x10] sm:$0xff]
  %v107 = vld [vmem:[%s3 + $0x18] sm:$0xff]
  %v108 = vld [vmem:[%s3 + $0x20] sm:$0xff]
  %v109 = vld [vmem:[%s3 + $0x28] sm:$0xff]
  %v110 = vld [vmem:[%s3 + $0x30] sm:$0xff]
  %v111 = vld [vmem:[%s3 + $0x38] sm:$0xff]
  %v112 = vld [vmem:[%s4] sm:$0x1]
  %v114 = vlaneseq
  %v115 = vshrl.u32 %v114, 7
  %v116 = vsub.s32 0, %v115
  %v117 = vrot.slane %v112, %v116
  %vm119 = vcmask 523264
  %v121 = vsel %vm119, %v103, 0
  %123 = vmatprep.subr.mxu0 0.0
  %124 = vmatpush1.msra.mxu0 %v104
  %125 = vmatprep.subr.mxu0 0.0
  %126 = vmatpush1.msra.mxu0 %v105
  %127 = vmatprep.subr.mxu0 0.0
  %128 = vmatpush1.msra.mxu0 %v106
  %129 = vmatprep.subr.mxu0 0.0
  %130 = vmatpush1.msra.mxu0 %v107
  %131 = vmatprep.subr.mxu0 0.0
  %132 = vmatpush1.msra.mxu0 %v108
  %133 = vmatprep.subr.mxu0 0.0
  %134 = vmatpush1.msra.mxu0 %v109
  %135 = vmatprep.subr.mxu0 0.0
  %136 = vmatpush1.msra.mxu0 %v110
  %137 = vmatprep.subr.mxu0 0.0
  %138 = vmatpush1.msra.mxu0 %v111
  %139 = vmatprep.subr.mxu0 0.0
  %140 = vmatpush1.msra.mxu0 0.0
  %141 = vmatprep.subr.mxu0 0.0
  %142 = vmatpush1.msra.mxu0 0.0
  %143 = vmatprep.subr.mxu0 0.0
  %144 = vmatpush1.msra.mxu0 0.0
  %145 = vmatprep.subr.mxu0 0.0
  %146 = vmatpush1.msra.mxu0 0.0
  %147 = vmatprep.subr.mxu0 0.0
  %148 = vmatpush1.msra.mxu0 0.0
  %149 = vmatprep.subr.mxu0 0.0
  %150 = vmatpush1.msra.mxu0 0.0
  %151 = vmatprep.subr.mxu0 0.0
  %152 = vmatpush1.msra.mxu0 0.0
  %153 = vmatprep.subr.mxu0 0.0
  %154 = vmatpush1.msra.mxu0 0.0
  %155 = vmatprep.subr.mxu0 0.0
  %156 = vmatpush1.msra.mxu0 0.0
  %157 = vmatprep.subr.mxu0 0.0
  %158 = vmatpush1.msra.mxu0 0.0
  %159 = vmatprep.subr.mxu0 0.0
  %160 = vmatpush1.msra.mxu0 0.0
  %161 = vmatprep.subr.mxu0 0.0
  %162 = vmatpush1.msra.mxu0 0.0
  %163 = vmatprep.subr.mxu0 0.0
  %164 = vmatpush1.msra.mxu0 0.0
  %165 = vmatprep.subr.mxu0 0.0
  %166 = vmatpush1.msra.mxu0 0.0
  %167 = vmatprep.subr.mxu0 0.0
  %168 = vmatpush1.msra.mxu0 0.0
  %169 = vmatprep.subr.mxu0 0.0
  %170 = vmatpush1.msra.mxu0 0.0
  %171 = vmatprep.subr.mxu0 0.0
  %172 = vmatpush1.msra.mxu0 0.0
  %173 = vmatprep.subr.mxu0 0.0
  %174 = vmatpush1.msra.mxu0 0.0
  %175 = vmatprep.subr.mxu0 0.0
  %176 = vmatpush1.msra.mxu0 0.0
  %177 = vmatprep.subr.mxu0 0.0
  %178 = vmatpush1.msra.mxu0 0.0
  %179 = vmatprep.subr.mxu0 0.0
  %180 = vmatpush1.msra.mxu0 0.0
  %181 = vmatprep.subr.mxu0 0.0
  %182 = vmatpush1.msra.mxu0 0.0
  %183 = vmatprep.subr.mxu0 0.0
  %184 = vmatpush1.msra.mxu0 0.0
  %185 = vmatprep.subr.mxu0 0.0
  %186 = vmatpush1.msra.mxu0 0.0
  %187 = vmatprep.mubr.f32.mxu0 0.0
  %188 = vmatmul.mubr.f32.gmra.mrb[0].mxu0 %v121
  %v189 = vpop.f32.mrb[0].mxu0
  %v190 = vadd.f32 %v117, %v189
  %v191 = vpop.f32.mrb[0].mxu0
  %192 = vdwg.mxu0
  %vm193 = vcmask 31744
  %194 = vst.msk [vmem:[%s5] sm:$0xff] %vm193, %v190
  // Predicated region
  $region22: #{tpu_custom_call.1} parent=0 // pred_check
    _
  $region23: #{tpu_custom_call.1} parent=0 // pred_check_branch
    %196 = sbr.rel (0) target = $region25
  $region24: #{tpu_custom_call.1} parent=0 // pred_region
    _
  $region25: #{tpu_custom_call.1} parent=0 // pred_fallthru
    _
  // Predicated region
  $region26: #{tpu_custom_call.1} parent=0 // pred_check
    _
  $region27: #{tpu_custom_call.1} parent=0 // pred_check_branch
    %198 = sbr.rel (0) target = $region29
  $region28: #{tpu_custom_call.1} parent=0 // pred_region
    _
  $region29: #{tpu_custom_call.1} parent=0 // pred_fallthru
    _

</llo_original>
